<compile_context>
chip_gen: v7x
topology: tpu7x:2x2x1
jax: 0.10.0
libtpu: 0.0.40
codegen_flags: <defaults>
</compile_context>

<pallas_src>
import jax
import jax.numpy as jnp
from jax import lax
from jax.experimental import pallas as pl
from jax.experimental.pallas import tpu as pltpu

WORD_VOCAB, WORD_DIM = 64, 32
SHAPE_VOCAB, SHAPE_DIM = 16, 16
TOTAL_VOCAB = WORD_VOCAB + SHAPE_VOCAB        # 80
OUT_DIM = WORD_DIM + SHAPE_DIM                # 48

# Default token-block size: big enough to hit the HBM roofline, small enough
# (double-buffered ids + output + one-hot ~ a few MiB) to fit comfortably in
# v7x's 32 MiB default scoped VMEM as well as v5e/v6e.
DEFAULT_BLOCK_ROWS = 1024


def _round_up(x, m):
    return ((x + m - 1) // m) * m


def word_model_kernel(wid_ref, sid_ref, tab_ref, out_ref):
    """One grid step: (blk,) word ids + (blk,) shape ids -> (blk, OUT_DIM)."""
    blk = wid_ref.shape[0]
    wid = wid_ref[...]                          # (blk, 1) int32, in [0, 64)
    sid = sid_ref[...]                          # (blk, 1) int32, in [64, 80)

    # Single fused one-hot over the combined vocab (built on the VPU).
    col = lax.broadcasted_iota(jnp.int32, (blk, TOTAL_VOCAB), 1)
    onehot = ((wid == col) | (sid == col)).astype(jnp.float32)   # two 1s per row

    # Gather-as-matmul on the MXU against the block-diagonal combined table:
    # (blk, 80) @ (80, 48) -> (blk, 48) == concat(word_emb, shape_emb).
    # Single contiguous lane-dense store.
    out_ref[...] = jnp.dot(onehot, tab_ref[...],
                           preferred_element_type=jnp.float32)


def word_model_forward(word_id, shape_id, word_table, shape_table,
                       block_rows=DEFAULT_BLOCK_ROWS):
    B, S = word_id.shape
    N = B * S

    # Block-diagonal fused table (built once in the wrapper, resident in VMEM).
    combined = jnp.zeros((TOTAL_VOCAB, OUT_DIM), dtype=jnp.float32)
    combined = combined.at[:WORD_VOCAB, :WORD_DIM].set(word_table)
    combined = combined.at[WORD_VOCAB:, WORD_DIM:].set(shape_table)

    wid = word_id.reshape(N).astype(jnp.int32)
    sid = shape_id.reshape(N).astype(jnp.int32) + WORD_VOCAB  # offset into fused table

    # Block size: multiple of 8 sublanes; pad N up to a whole number of blocks.
    blk = min(block_rows, _round_up(N, 8))
    n_pad = _round_up(N, blk)
    wid = jnp.pad(wid, (0, n_pad - N)).reshape(n_pad, 1)
    sid = jnp.pad(sid, (0, n_pad - N),
                  constant_values=WORD_VOCAB).reshape(n_pad, 1)

    grid = (n_pad // blk,)

    out = pl.pallas_call(
        word_model_kernel,
        out_shape=jax.ShapeDtypeStruct((n_pad, OUT_DIM), jnp.float32),
        grid_spec=pltpu.PrefetchScalarGridSpec(
            num_scalar_prefetch=0,
            grid=grid,
            in_specs=[
                pl.BlockSpec((blk, 1), lambda i: (i, 0)),                 # word ids
                pl.BlockSpec((blk, 1), lambda i: (i, 0)),                 # shape ids (offset)
                pl.BlockSpec((TOTAL_VOCAB, OUT_DIM), lambda i: (0, 0)),   # fused table, resident
            ],
            out_specs=pl.BlockSpec((blk, OUT_DIM), lambda i: (i, 0)),
        ),
        compiler_params=pltpu.CompilerParams(
            dimension_semantics=("parallel",),   # megacore sharding on v7x
            vmem_limit_bytes=32 << 20,           # safe on v7x (64 MiB phys) and v5e/v6e
        ),
    )(wid, sid, combined)

    return out[:N].reshape(B, S, OUT_DIM)


if __name__ == "__main__":
    key = jax.random.PRNGKey(0)
    k_w, k_s, k_wid, k_sid = jax.random.split(key, 4)

    # Deterministic synthetic parameters (same role as nn.Embedding weights).
    word_table = jax.random.normal(k_w, (WORD_VOCAB, WORD_DIM), dtype=jnp.float32)
    shape_table = jax.random.normal(k_s, (SHAPE_VOCAB, SHAPE_DIM), dtype=jnp.float32)

    # Small index tensors: batch=2, seq=8.
    B, S = 2, 8
    word_id = jax.random.randint(k_wid, (B, S), 0, WORD_VOCAB, dtype=jnp.int32)
    shape_id = jax.random.randint(k_sid, (B, S), 0, SHAPE_VOCAB, dtype=jnp.int32)

    # Pure-JAX reference (exact embedding-lookup + concat semantics).
    ref = jnp.concatenate([word_table[word_id], shape_table[shape_id]], axis=-1)

    # Single-block path.
    out = word_model_forward(word_id, shape_id, word_table, shape_table)
    out = jax.block_until_ready(out)
    assert out.shape == (B, S, OUT_DIM), out.shape
    assert jnp.allclose(out, ref, atol=1e-5), "mismatch vs reference (single block)"

    # Multi-block path (exercise the grid / pipelining with a tiny block size).
    out2 = word_model_forward(word_id, shape_id, word_table, shape_table,
                              block_rows=8)
    out2 = jax.block_until_ready(out2)
    assert jnp.allclose(out2, ref, atol=1e-5), "mismatch vs reference (tiled)"

    print("KERNEL_OK")
</pallas_src>

<mosaic_0001>
module attributes {stable_mosaic.version = 11 : i64} {
  func.func @word_model_kernel(%arg0: i32, %arg1: memref<16x1xi32, #tpu.memory_space<vmem>>, %arg2: memref<16x1xi32, #tpu.memory_space<vmem>>, %arg3: memref<80x48xf32, #tpu.memory_space<vmem>>, %arg4: memref<16x48xf32, #tpu.memory_space<vmem>>) attributes {dimension_semantics = [#tpu.dimension_semantics<parallel>], iteration_bounds = array<i64: 1>, scalar_prefetch = 0 : i64, scratch_operands = 0 : i64, tpu.core_type = #tpu.core_type<tc>, window_params = [{transform_indices = @transform_0, window_bounds = array<i64: 16, 1>}, {transform_indices = @transform_1, window_bounds = array<i64: 16, 1>}, {pipeline_mode = #tpu.pipeline_mode<synchronous>, transform_indices = @transform_2, window_bounds = array<i64: 80, 48>}, {transform_indices = @transform_3, window_bounds = array<i64: 16, 48>}]} {
    %c0 = arith.constant 0 : index
    %c0_0 = arith.constant 0 : index
    %0 = vector.load %arg1[%c0, %c0_0] : memref<16x1xi32, #tpu.memory_space<vmem>>, vector<16x1xi32>
    %c0_1 = arith.constant 0 : index
    %c0_2 = arith.constant 0 : index
    %1 = vector.load %arg2[%c0_1, %c0_2] : memref<16x1xi32, #tpu.memory_space<vmem>>, vector<16x1xi32>
    %2 = tpu.iota {dimensions = array<i32: 1>} : vector<16x80xi32>
    %3 = vector.broadcast %0 : vector<16x1xi32> to vector<16x80xi32>
    %4 = arith.cmpi eq, %3, %2 : vector<16x80xi32>
    %5 = vector.broadcast %1 : vector<16x1xi32> to vector<16x80xi32>
    %6 = arith.cmpi eq, %5, %2 : vector<16x80xi32>
    %7 = arith.ori %4, %6 : vector<16x80xi1>
    %8 = arith.extui %7 : vector<16x80xi1> to vector<16x80xi32>
    %9 = arith.sitofp %8 : vector<16x80xi32> to vector<16x80xf32>
    %c0_3 = arith.constant 0 : index
    %c0_4 = arith.constant 0 : index
    %10 = vector.load %arg3[%c0_3, %c0_4] : memref<80x48xf32, #tpu.memory_space<vmem>>, vector<80x48xf32>
    %cst = arith.constant dense<0.000000e+00> : vector<16x48xf32>
    %11 = tpu.matmul %9, %10, %cst {dimension_numbers = #tpu.dot_dimension_numbers<[1], [0], [0], [1], [0, 0, 1, 1], [], []>} : vector<16x80xf32>, vector<80x48xf32>, vector<16x48xf32> -> vector<16x48xf32>
    %c0_5 = arith.constant 0 : index
    %c0_6 = arith.constant 0 : index
    %12 = vector.load %arg4[%c0_5, %c0_6] : memref<16x48xf32, #tpu.memory_space<vmem>>, vector<16x48xf32>
    tpu.vector_store %arg4[%c0_5, %c0_6], %11 {strides = array<i32>} : memref<16x48xf32, #tpu.memory_space<vmem>>, vector<16x48xf32>,
    return
  }
  func.func @transform_0(%arg0: i32) -> (i32, i32) {
    %c0_i32 = arith.constant 0 : i32
    %c0_i32_0 = arith.constant 0 : i32
    return %arg0, %c0_i32 : i32, i32
  }
  func.func @transform_1(%arg0: i32) -> (i32, i32) {
    %c0_i32 = arith.constant 0 : i32
    %c0_i32_0 = arith.constant 0 : i32
    return %arg0, %c0_i32 : i32, i32
  }
  func.func @transform_2(%arg0: i32) -> (i32, i32) {
    %c0_i32 = arith.constant 0 : i32
    %c0_i32_0 = arith.constant 0 : i32
    %c0_i32_1 = arith.constant 0 : i32
    return %c0_i32, %c0_i32_0 : i32, i32
  }
  func.func @transform_3(%arg0: i32) -> (i32, i32) {
    %c0_i32 = arith.constant 0 : i32
    %c0_i32_0 = arith.constant 0 : i32
    return %arg0, %c0_i32 : i32, i32
  }
}

</mosaic_0001>

<llo_original>
// kernel: tpu_custom_call.1
$region0: #{tpu_custom_call.1}
  #allocation0 [shape = 'u32[]', space=smem, size = 0x4, offset = 0x4, fixed_abs, tag = 'smem constant byte address 0x4 - core index']
  #allocation1 [shape = 'u32[144,128]{1,0:T(1,128)}', space=vmem, size = 0x12000, scoped, tag = 'internal scratch']
  %s0 = inlined_call_operand.vmem [shape: s32[16,1], index: 0, kind: input, shape index: {}]
  %s1 = inlined_call_operand.vmem [shape: s32[16,1], index: 1, kind: input, shape index: {}]
  %s2 = inlined_call_operand.vmem [shape: f32[80,48], index: 2, kind: input, shape index: {}]
  %s3 = inlined_call_operand.hbm [shape: f32[16,48], index: 3, kind: output, shape index: {}]
  %s4 = sld [smem:[#allocation0]]
  $region22: #{tpu_custom_call.1} parent=0
    _
  %s6 = ssub.s32 1, %s4
  %s7 = scalar_select 0, %s6, %s4
  $region1: #{tpu_custom_call.1} parent=0
    #allocation2 [shape = 'u8[8192]{0}', space=vmem, size = 0x2000, scoped, tag = 'output window, operand 0, single buffered']
    #allocation3 [shape = 's32[1]{0}', space=sflag, size = 0x4, scoped, tag = 'scoped memory for tpu_custom_call.1']
    %8 = vsyncpa [#allocation3], 0
    // Predicated region
    $region2: #{tpu_custom_call.1} parent=1 // pred_check
      _
    $region3: #{tpu_custom_call.1} parent=1 // pred_check_branch
      %10 = sbr.rel (0) target = $region5
    $region4: #{tpu_custom_call.1} parent=1 // pred_region
      _
    $region5: #{tpu_custom_call.1} parent=1 // pred_fallthru
      _
    // Predicated region
    $region6: #{tpu_custom_call.1} parent=1 // pred_check
      _
    $region7: #{tpu_custom_call.1} parent=1 // pred_check_branch
      %12 = sbr.rel (0) target = $region9
    $region8: #{tpu_custom_call.1} parent=1 // pred_region
      _
    $region9: #{tpu_custom_call.1} parent=1 // pred_fallthru
      _
    // Predicated region
    $region10: #{tpu_custom_call.1} parent=1 // pred_check
      _
    $region11: #{tpu_custom_call.1} parent=1 // pred_check_branch
      %14 = sbr.rel (0) target = $region13
    $region12: #{tpu_custom_call.1} parent=1 // pred_region
      _
    $region13: #{tpu_custom_call.1} parent=1 // pred_fallthru
      _
    %v15 = vld [vmem:[%s0] sm:$0xff]
    %v16 = vld [vmem:[%s0 + $0x8] sm:$0xff]
    %v17 = vld [vmem:[%s1] sm:$0xff]
    %v18 = vld [vmem:[%s1 + $0x8] sm:$0xff]
    %v19 = vlaneseq
    %v20 = vand.u32 %v19, 127
    %21 = vset.pattern.permute.xlu0 0
    %22 = vperm.xlu0 %21, %v15
    %v23 = vpop.permute.xlu0 %22
    %24 = vset.pattern.permute.xlu0 0
    %25 = vperm.xlu0 %24, %v16
    %v26 = vpop.permute.xlu0 %25
    %vm27 = vcmp.eq.s32.totalorder %v23, %v20
    %vm28 = vcmp.eq.s32.totalorder %v26, %v20
    %29 = vset.pattern.permute.xlu0 0
    %30 = vperm.xlu0 %29, %v17
    %v31 = vpop.permute.xlu0 %30
    %32 = vset.pattern.permute.xlu0 0
    %33 = vperm.xlu0 %32, %v18
    %v34 = vpop.permute.xlu0 %33
    %vm35 = vcmp.eq.s32.totalorder %v31, %v20
    %vm36 = vcmp.eq.s32.totalorder %v34, %v20
    %vm37 = vmor %vm27, %vm35
    %vm38 = vmor %vm28, %vm36
    %v39 = vsel %vm37, 1, 0
    %v40 = vsel %vm38, 1, 0
    %v41 = vcvt.s32.f32 %v39
    %v42 = vcvt.s32.f32 %v40
    %v43 = vld [vmem:[%s2] sm:$0xff]
    %v44 = vld [vmem:[%s2 + $0x8] sm:$0xff]
    %v45 = vld [vmem:[%s2 + $0x10] sm:$0xff]
    %v46 = vld [vmem:[%s2 + $0x18] sm:$0xff]
    %v47 = vld [vmem:[%s2 + $0x20] sm:$0xff]
    %v48 = vld [vmem:[%s2 + $0x28] sm:$0xff]
    %v49 = vld [vmem:[%s2 + $0x30] sm:$0xff]
    %v50 = vld [vmem:[%s2 + $0x38] sm:$0xff]
    %v51 = vld [vmem:[%s2 + $0x40] sm:$0xff]
    %v52 = vld [vmem:[%s2 + $0x48] sm:$0xff]
    %vm53 = vcmask 654336
    %v55 = vsel %vm53, %v41, 0
    %v58 = vsel %vm53, %v42, 0
    %60 = vmatprep.subr.mxu0 0.0
    %61 = vmatpush1.msra.mxu0 %v43
    %62 = vmatprep.subr.mxu0 0.0
    %63 = vmatpush1.msra.mxu0 %v44
    %64 = vmatprep.subr.mxu0 0.0
    %65 = vmatpush1.msra.mxu0 %v45
    %66 = vmatprep.subr.mxu0 0.0
    %67 = vmatpush1.msra.mxu0 %v46
    %68 = vmatprep.subr.mxu0 0.0
    %69 = vmatpush1.msra.mxu0 %v47
    %70 = vmatprep.subr.mxu0 0.0
    %71 = vmatpush1.msra.mxu0 %v48
    %72 = vmatprep.subr.mxu0 0.0
    %73 = vmatpush1.msra.mxu0 %v49
    %74 = vmatprep.subr.mxu0 0.0
    %75 = vmatpush1.msra.mxu0 %v50
    %76 = vmatprep.subr.mxu0 0.0
    %77 = vmatpush1.msra.mxu0 %v51
    %78 = vmatprep.subr.mxu0 0.0
    %79 = vmatpush1.msra.mxu0 %v52
    %80 = vmatprep.subr.mxu0 0.0
    %81 = vmatpush1.msra.mxu0 0.0
    %82 = vmatprep.subr.mxu0 0.0
    %83 = vmatpush1.msra.mxu0 0.0
    %84 = vmatprep.subr.mxu0 0.0
    %85 = vmatpush1.msra.mxu0 0.0
    %86 = vmatprep.subr.mxu0 0.0
    %87 = vmatpush1.msra.mxu0 0.0
    %88 = vmatprep.subr.mxu0 0.0
    %89 = vmatpush1.msra.mxu0 0.0
    %90 = vmatprep.subr.mxu0 0.0
    %91 = vmatpush1.msra.mxu0 0.0
    %92 = vmatprep.subr.mxu0 0.0
    %93 = vmatpush1.msra.mxu0 0.0
    %94 = vmatprep.subr.mxu0 0.0
    %95 = vmatpush1.msra.mxu0 0.0
    %96 = vmatprep.subr.mxu0 0.0
    %97 = vmatpush1.msra.mxu0 0.0
    %98 = vmatprep.subr.mxu0 0.0
    %99 = vmatpush1.msra.mxu0 0.0
    %100 = vmatprep.subr.mxu0 0.0
    %101 = vmatpush1.msra.mxu0 0.0
    %102 = vmatprep.subr.mxu0 0.0
    %103 = vmatpush1.msra.mxu0 0.0
    %104 = vmatprep.subr.mxu0 0.0
    %105 = vmatpush1.msra.mxu0 0.0
    %106 = vmatprep.subr.mxu0 0.0
    %107 = vmatpush1.msra.mxu0 0.0
    %108 = vmatprep.subr.mxu0 0.0
    %109 = vmatpush1.msra.mxu0 0.0
    %110 = vmatprep.subr.mxu0 0.0
    %111 = vmatpush1.msra.mxu0 0.0
    %112 = vmatprep.subr.mxu0 0.0
    %113 = vmatpush1.msra.mxu0 0.0
    %114 = vmatprep.subr.mxu0 0.0
    %115 = vmatpush1.msra.mxu0 0.0
    %116 = vmatprep.subr.mxu0 0.0
    %117 = vmatpush1.msra.mxu0 0.0
    %118 = vmatprep.subr.mxu0 0.0
    %119 = vmatpush1.msra.mxu0 0.0
    %120 = vmatprep.subr.mxu0 0.0
    %121 = vmatpush1.msra.mxu0 0.0
    %122 = vmatprep.subr.mxu0 0.0
    %123 = vmatpush1.msra.mxu0 0.0
    %124 = vmatprep.mubr.f32.mxu0 0.0
    %125 = vmatmul.mubr.f32.gmra.mrb[0].mxu0 %v55
    %v126 = vpop.f32.mrb[0].mxu0
    %v127 = vadd.f32 0.0, %v126
    %v128 = vpop.f32.mrb[0].mxu0
    %129 = vmatprep.mubr.f32.mxu0 0.0
    %130 = vmatmul.mubr.f32.gmra.mrb[0].mxu0 %v58
    %v131 = vpop.f32.mrb[0].mxu0
    %v132 = vadd.f32 0.0, %v131
    %v133 = vpop.f32.mrb[0].mxu0
    %134 = vdwg.mxu0
    %vm135 = vcmask 392192
    %136 = vst.msk [vmem:[#allocation2] sm:$0xff] %vm135, %v127
    %137 = vst.msk [vmem:[#allocation2 + $0x8] sm:$0xff] %vm135, %v132
    // Predicated region
    $region14: #{tpu_custom_call.1} parent=1 // pred_check
      _
    $region15: #{tpu_custom_call.1} parent=1 // pred_check_branch
      %139 = sbr.rel (0) target = $region17
    $region16: #{tpu_custom_call.1} parent=1 // pred_region
      %s141 = ssub.s32 256, 256
      %142 = vsyncadd [#allocation3], %s141
      %s143 = sshll.u32 [#allocation2], 4
      %s144 = int_to_ptr.vmem [resolvable:$true] %s143
      %149 = dma.vmem_to_hbm [thread:$0]  %s144, 256, %s3, [#allocation3], 128, 128, 8
    $region17: #{tpu_custom_call.1} parent=1 // pred_fallthru
      _
    // Predicated region
    $region18: #{tpu_custom_call.1} parent=1 // pred_check
      _
    $region19: #{tpu_custom_call.1} parent=1 // pred_check_branch
      %151 = sbr.rel (0) target = $region21
    $region20: #{tpu_custom_call.1} parent=1 // pred_region
      %152 = dma.done [#allocation3], 256
    $region21: #{tpu_custom_call.1} parent=1 // pred_fallthru
      _
    %153 = vsyncpa [#allocation3], 1

</llo_original>
